<compile_context>
chip_gen: v7x
topology: tpu7x:2x2x1
jax: 0.10.0
libtpu: 0.0.40
codegen_flags: <defaults>
</compile_context>

<pallas_src>
import functools

import numpy as np
import jax
import jax.numpy as jnp
from jax.experimental import pallas as pl
from jax.experimental.pallas import tpu as pltpu

_LANE = 128
_SUBLANE = 8
_MAX_ROW_TILE = 512          # cap on rows of x per grid step
_MAX_K_TILE = 512            # cap on the dim_in (contraction) tile
_VMEM_BUDGET = 24 * 1024 * 1024   # conservative vs. 32 MiB default scoped VMEM


def _round_up(v, m):
    return ((v + m - 1) // m) * m


def _pick_row_tile(n_pad, tk, dout_pad, itemsize=4):
    """Largest multiple-of-8 divisor of n_pad that fits the VMEM budget (<= cap).

    Avoids padding N up to a multiple of a fixed 512-row tile (no wasted MXU /
    HBM work for e.g. N = 520) while staying inside the per-generation VMEM
    budget (v7x has only 64 MiB physical / 32 MiB default scoped VMEM).
    """
    w_bytes = 2 * tk * dout_pad * itemsize          # double-buffered weight block

    def fits(tm):
        # 2x x-block + 2x out-block (double buffered) + f32 accumulator scratch
        return (2 * tm * tk + 2 * tm * dout_pad + tm * dout_pad) * itemsize \
            + w_bytes <= _VMEM_BUDGET

    cap = min(_MAX_ROW_TILE, n_pad)
    best = _SUBLANE
    m = n_pad // _SUBLANE
    for k in range(1, cap // _SUBLANE + 1):
        tm = _SUBLANE * k
        if m % k == 0 and fits(tm):
            best = tm
    return best


# ---------------------------------------------------------------------------
# Kernels
# ---------------------------------------------------------------------------
def _sample_beta_kernel(mu_ref, sigma_ref, eps_ref, beta_ref):
    """beta = mu + sigma * eps (sigma pre-sqrt'ed). Runs exactly once."""
    beta_ref[...] = mu_ref[...] + sigma_ref[...] * eps_ref[...]


def _matmul_kernel(x_ref, w_ref, o_ref, acc_ref, *, mxu_dtype):
    """out[i] = sum_k x[i,k] @ w[k].  K axis is the last grid axis ("arbitrary")."""
    @pl.when(pl.program_id(1) == 0)
    def _init():
        acc_ref[...] = jnp.zeros_like(acc_ref)

    acc_ref[...] += jnp.dot(
        x_ref[...].astype(mxu_dtype),
        w_ref[...].astype(mxu_dtype),
        preferred_element_type=jnp.float32,
    )

    @pl.when(pl.program_id(1) == pl.num_programs(1) - 1)
    def _store():
        o_ref[...] = acc_ref[...].astype(o_ref.dtype)


# ---------------------------------------------------------------------------
# Pallas wrappers
# ---------------------------------------------------------------------------
def _sample_beta(mu_t, sigma_t, eps):
    """One-shot sample of the full (din_pad, dout_pad) beta block."""
    din_pad, dout_pad = mu_t.shape
    # Weight tensor is tiny vs. x/out traffic -> single full-array block.
    spec = pl.BlockSpec((din_pad, dout_pad), lambda i: (0, 0))
    return pl.pallas_call(
        _sample_beta_kernel,
        grid=(1,),
        in_specs=[spec, spec, spec],
        out_specs=spec,
        out_shape=jax.ShapeDtypeStruct((din_pad, dout_pad), jnp.float32),
    )(mu_t, sigma_t, eps)


def _matmul(x, w_pad, mxu_dtype):
    """Row-tiled, K-tiled x @ w_pad.  w_pad: (din_pad, dout_pad), already padded."""
    n, dim_in = x.shape
    din_pad, dout_pad = w_pad.shape

    # Pad the contraction dim only when the weights were K-padded at init.
    if dim_in != din_pad:
        x = jnp.pad(x, ((0, 0), (0, din_pad - dim_in)))
    # Pad rows only to the sublane multiple (8), never to a full 512 tile.
    n_pad = _round_up(max(n, _SUBLANE), _SUBLANE)
    if n_pad != n:
        x = jnp.pad(x, ((0, n_pad - n), (0, 0)))

    tk = din_pad if din_pad <= _MAX_K_TILE else _MAX_K_TILE
    nk = din_pad // tk
    tm = _pick_row_tile(n_pad, tk, dout_pad)
    nt = n_pad // tm

    kernel = functools.partial(_matmul_kernel, mxu_dtype=mxu_dtype)
    return pl.pallas_call(
        kernel,
        grid=(nt, nk),
        in_specs=[
            pl.BlockSpec((tm, tk), lambda i, k: (i, k)),
            pl.BlockSpec((tk, dout_pad), lambda i, k: (k, 0)),
        ],
        out_specs=pl.BlockSpec((tm, dout_pad), lambda i, k: (i, 0)),
        out_shape=jax.ShapeDtypeStruct((n_pad, dout_pad), x.dtype),
        scratch_shapes=[pltpu.VMEM((tm, dout_pad), jnp.float32)],
        compiler_params=pltpu.CompilerParams(
            # Row tiles are disjoint output blocks -> parallel (v7x megacore);
            # K is a reduction carried in the accumulator scratch -> arbitrary.
            dimension_semantics=("parallel", "arbitrary"),
        ),
    )(x, w_pad)


# ---------------------------------------------------------------------------
# jitted forward paths
# ---------------------------------------------------------------------------
@functools.partial(jax.jit, static_argnames=("dim_out", "mxu_dtype"))
def blm_forward_mean(x, mu_t, *, dim_out, mxu_dtype=jnp.float32):
    out_pad = _matmul(x, mu_t, mxu_dtype)
    return out_pad[: x.shape[0], :dim_out]


@functools.partial(jax.jit, static_argnames=("dim_out", "mxu_dtype"))
def blm_forward_sample(x, mu_t, sigma_t, key, *, dim_out, mxu_dtype=jnp.float32):
    # eps drawn once for the whole forward; padded rows/cols have sigma = mu = 0
    # so the padded region of beta stays exactly zero.
    eps = jax.random.normal(key, mu_t.shape, dtype=jnp.float32)
    beta_pad = _sample_beta(mu_t, sigma_t, eps)
    out_pad = _matmul(x, beta_pad, mxu_dtype)
    return (out_pad[: x.shape[0], :dim_out],
            beta_pad[: x.shape[1], :dim_out])


# ---------------------------------------------------------------------------
# Module
# ---------------------------------------------------------------------------
class BLM:
    """JAX mirror of the PyTorch BLM module (forward path only)."""

    def __init__(self, dim_in, dim_out, sig2_inv, key, mxu_dtype=jnp.float32):
        self.dim_in = dim_in
        self.dim_out = dim_out
        self.sig2_inv = sig2_inv
        self.mxu_dtype = mxu_dtype
        self.dout_pad = _round_up(dim_out, _LANE)            # lane-dense output
        self.din_pad = (dim_in if dim_in <= _MAX_K_TILE
                        else _round_up(dim_in, _MAX_K_TILE))  # K-tiling friendly

        # init_parameters(): PyTorch hard-codes beta_mu = [[2.0]] (broadcast in
        # forward); broadcast the same constant to the declared shape.
        # beta_sig2 <- exp(Normal(-9, 0.01)).
        self.beta_mu = jnp.full((dim_out, dim_in), 2.0, dtype=jnp.float32)
        noise = -9.0 + 0.01 * jax.random.normal(key, (dim_out, dim_in), jnp.float32)
        self.beta_sig2 = jnp.exp(noise)

        # Kernel-side parameter cache: transposed (dim_in, dim_out), sqrt taken
        # once, padded with zeros (padded rows/cols stay exactly zero through
        # sampling and the matmul).
        mu_t = jnp.zeros((self.din_pad, self.dout_pad), jnp.float32)
        self._mu_t = mu_t.at[:dim_in, :dim_out].set(self.beta_mu.T)
        sigma_t = jnp.zeros((self.din_pad, self.dout_pad), jnp.float32)
        self._sigma_t = sigma_t.at[:dim_in, :dim_out].set(jnp.sqrt(self.beta_sig2).T)

        # TODO(synk): precompute()/fixed_point_updates() (torch.inverse-based
        # posterior updates) are training-time utilities, not part of forward.

    def forward(self, x, key=None, sample=True, return_beta=False):
        if sample:
            if key is None:
                raise ValueError("key is required when sample=True")
            out, beta = blm_forward_sample(
                x, self._mu_t, self._sigma_t, key,
                dim_out=self.dim_out, mxu_dtype=self.mxu_dtype)
            return (out, beta) if return_beta else out
        return blm_forward_mean(
            x, self._mu_t, dim_out=self.dim_out, mxu_dtype=self.mxu_dtype)


if __name__ == "__main__":
    key = jax.random.PRNGKey(0)
    k_init, k_x, k_eps = jax.random.split(key, 3)

    N, DIM_IN, DIM_OUT = 8, 32, 16
    SIG2_INV = 10.0

    model = BLM(DIM_IN, DIM_OUT, SIG2_INV, k_init)
    x = jax.random.normal(k_x, (N, DIM_IN), jnp.float32)

    # --- sample=True path (beta sampled once, then reused as matmul weight) ---
    out_sample, beta = model.forward(x, key=k_eps, sample=True, return_beta=True)
    out_sample = jax.block_until_ready(out_sample)
    beta = jax.block_until_ready(beta)

    # --- sample=False fast path ---
    out_mean = jax.block_until_ready(model.forward(x, sample=False))

    # --- correctness checks ---
    assert out_sample.shape == (N, DIM_OUT)
    assert out_mean.shape == (N, DIM_OUT)
    assert beta.shape == (DIM_IN, DIM_OUT)

    x64 = np.asarray(x, np.float64)

    # Deterministic path is exactly x @ beta_mu.T.
    ref_mean = x64 @ np.asarray(model.beta_mu, np.float64).T
    assert np.allclose(np.asarray(out_mean, np.float64), ref_mean,
                       atol=1e-3, rtol=1e-3)

    # Sampled beta must equal mu + sqrt(sig2) * eps for the key's eps draw.
    eps_full = jax.random.normal(k_eps, (model.din_pad, model.dout_pad), jnp.float32)
    ref_beta = model.beta_mu.T + jnp.sqrt(model.beta_sig2).T * eps_full[:DIM_IN, :DIM_OUT]
    assert np.allclose(np.asarray(beta), np.asarray(ref_beta), atol=1e-5, rtol=1e-5)

    # Sampled output must equal x @ beta for the beta the kernel produced.
    ref_sample = x64 @ np.asarray(beta, np.float64)
    assert np.allclose(np.asarray(out_sample, np.float64), ref_sample,
                       atol=1e-3, rtol=1e-3)

    # Determinism: same key -> same draw -> same output.
    out_sample2 = jax.block_until_ready(model.forward(x, key=k_eps, sample=True))
    assert jnp.allclose(out_sample, out_sample2, atol=1e-6, rtol=1e-6)

    # Optional bf16 MXU feed (v6e/v7x throughput option): loose tolerance.
    model_bf16 = BLM(DIM_IN, DIM_OUT, SIG2_INV, k_init, mxu_dtype=jnp.bfloat16)
    out_bf16 = jax.block_until_ready(model_bf16.forward(x, sample=False))
    assert np.allclose(np.asarray(out_bf16, np.float64), ref_mean,
                       atol=0.3, rtol=5e-2)

    print("KERNEL_OK")
</pallas_src>

<mosaic_0001>
module attributes {stable_mosaic.version = 11 : i64} {
  func.func @_sample_beta_kernel(%arg0: i32, %arg1: memref<32x128xf32, #tpu.memory_space<vmem>>, %arg2: memref<32x128xf32, #tpu.memory_space<vmem>>, %arg3: memref<32x128xf32, #tpu.memory_space<vmem>>, %arg4: memref<32x128xf32, #tpu.memory_space<vmem>>) attributes {dimension_semantics = [#tpu.dimension_semantics<arbitrary>], iteration_bounds = array<i64: 1>, scalar_prefetch = 0 : i64, scratch_operands = 0 : i64, tpu.core_type = #tpu.core_type<tc>, window_params = [{pipeline_mode = #tpu.pipeline_mode<synchronous>, transform_indices = @transform_0, window_bounds = array<i64: 32, 128>}, {pipeline_mode = #tpu.pipeline_mode<synchronous>, transform_indices = @transform_1, window_bounds = array<i64: 32, 128>}, {pipeline_mode = #tpu.pipeline_mode<synchronous>, transform_indices = @transform_2, window_bounds = array<i64: 32, 128>}, {pipeline_mode = #tpu.pipeline_mode<synchronous>, transform_indices = @transform_3, window_bounds = array<i64: 32, 128>}]} {
    %c0 = arith.constant 0 : index
    %c0_0 = arith.constant 0 : index
    %0 = vector.load %arg1[%c0, %c0_0] : memref<32x128xf32, #tpu.memory_space<vmem>>, vector<32x128xf32>
    %c0_1 = arith.constant 0 : index
    %c0_2 = arith.constant 0 : index
    %1 = vector.load %arg2[%c0_1, %c0_2] : memref<32x128xf32, #tpu.memory_space<vmem>>, vector<32x128xf32>
    %c0_3 = arith.constant 0 : index
    %c0_4 = arith.constant 0 : index
    %2 = vector.load %arg3[%c0_3, %c0_4] : memref<32x128xf32, #tpu.memory_space<vmem>>, vector<32x128xf32>
    %3 = arith.mulf %1, %2 : vector<32x128xf32>
    %4 = arith.addf %0, %3 : vector<32x128xf32>
    %c0_5 = arith.constant 0 : index
    %c0_6 = arith.constant 0 : index
    %5 = vector.load %arg4[%c0_5, %c0_6] : memref<32x128xf32, #tpu.memory_space<vmem>>, vector<32x128xf32>
    tpu.vector_store %arg4[%c0_5, %c0_6], %4 {strides = array<i32>} : memref<32x128xf32, #tpu.memory_space<vmem>>, vector<32x128xf32>,
    return
  }
  func.func @transform_0(%arg0: i32) -> (i32, i32) {
    %c0_i32 = arith.constant 0 : i32
    %c0_i32_0 = arith.constant 0 : i32
    %c0_i32_1 = arith.constant 0 : i32
    return %c0_i32, %c0_i32_0 : i32, i32
  }
  func.func @transform_1(%arg0: i32) -> (i32, i32) {
    %c0_i32 = arith.constant 0 : i32
    %c0_i32_0 = arith.constant 0 : i32
    %c0_i32_1 = arith.constant 0 : i32
    return %c0_i32, %c0_i32_0 : i32, i32
  }
  func.func @transform_2(%arg0: i32) -> (i32, i32) {
    %c0_i32 = arith.constant 0 : i32
    %c0_i32_0 = arith.constant 0 : i32
    %c0_i32_1 = arith.constant 0 : i32
    return %c0_i32, %c0_i32_0 : i32, i32
  }
  func.func @transform_3(%arg0: i32) -> (i32, i32) {
    %c0_i32 = arith.constant 0 : i32
    %c0_i32_0 = arith.constant 0 : i32
    %c0_i32_1 = arith.constant 0 : i32
    return %c0_i32, %c0_i32_0 : i32, i32
  }
}

module attributes {stable_mosaic.version = 11 : i64} {
  func.func @_matmul_kernel(%arg0: i32, %arg1: i32, %arg2: memref<8x32xf32, #tpu.memory_space<vmem>>, %arg3: memref<32x128xf32, #tpu.memory_space<vmem>>, %arg4: memref<8x128xf32, #tpu.memory_space<vmem>>, %arg5: memref<8x128xf32, #tpu.memory_space<vmem>>) attributes {dimension_semantics = [#tpu.dimension_semantics<parallel>, #tpu.dimension_semantics<arbitrary>], iteration_bounds = array<i64: 1, 1>, scalar_prefetch = 0 : i64, scratch_operands = 1 : i64, tpu.core_type = #tpu.core_type<tc>, window_params = [{transform_indices = @transform_0, window_bounds = array<i64: 8, 32>}, {transform_indices = @transform_1, window_bounds = array<i64: 32, 128>}, {transform_indices = @transform_2, window_bounds = array<i64: 8, 128>}]} {
    %c0_i32 = arith.constant 0 : i32
    %0 = arith.cmpi eq, %arg1, %c0_i32 : i32
    %1 = arith.extui %0 : i1 to i32
    %c0_i32_0 = arith.constant 0 : i32
    %2 = arith.cmpi ne, %1, %c0_i32_0 : i32
    scf.if %2 {
      %cst_10 = arith.constant 0.000000e+00 : f32
      %12 = vector.broadcast %cst_10 : f32 to vector<8x128xf32>
      %c0_11 = arith.constant 0 : index
      %c0_12 = arith.constant 0 : index
      %13 = vector.load %arg5[%c0_11, %c0_12] : memref<8x128xf32, #tpu.memory_space<vmem>>, vector<8x128xf32>
      tpu.vector_store %arg5[%c0_11, %c0_12], %12 {strides = array<i32>} : memref<8x128xf32, #tpu.memory_space<vmem>>, vector<8x128xf32>,
    } else {
    }
    %c0 = arith.constant 0 : index
    %c0_1 = arith.constant 0 : index
    %3 = vector.load %arg5[%c0, %c0_1] : memref<8x128xf32, #tpu.memory_space<vmem>>, vector<8x128xf32>
    %c0_2 = arith.constant 0 : index
    %c0_3 = arith.constant 0 : index
    %4 = vector.load %arg2[%c0_2, %c0_3] : memref<8x32xf32, #tpu.memory_space<vmem>>, vector<8x32xf32>
    %c0_4 = arith.constant 0 : index
    %c0_5 = arith.constant 0 : index
    %5 = vector.load %arg3[%c0_4, %c0_5] : memref<32x128xf32, #tpu.memory_space<vmem>>, vector<32x128xf32>
    %cst = arith.constant dense<0.000000e+00> : vector<8x128xf32>
    %6 = tpu.matmul %4, %5, %cst {dimension_numbers = #tpu.dot_dimension_numbers<[1], [0], [0], [1], [0, 0, 1, 1], [], []>} : vector<8x32xf32>, vector<32x128xf32>, vector<8x128xf32> -> vector<8x128xf32>
    %7 = arith.addf %3, %6 : vector<8x128xf32>
    %c0_6 = arith.constant 0 : index
    %c0_7 = arith.constant 0 : index
    %8 = vector.load %arg5[%c0_6, %c0_7] : memref<8x128xf32, #tpu.memory_space<vmem>>, vector<8x128xf32>
    tpu.vector_store %arg5[%c0_6, %c0_7], %7 {strides = array<i32>} : memref<8x128xf32, #tpu.memory_space<vmem>>, vector<8x128xf32>,
    %c0_i32_8 = arith.constant 0 : i32
    %9 = arith.cmpi eq, %arg1, %c0_i32_8 : i32
    %10 = arith.extui %9 : i1 to i32
    %c0_i32_9 = arith.constant 0 : i32
    %11 = arith.cmpi ne, %10, %c0_i32_9 : i32
    scf.if %11 {
      %c0_10 = arith.constant 0 : index
      %c0_11 = arith.constant 0 : index
      %12 = vector.load %arg5[%c0_10, %c0_11] : memref<8x128xf32, #tpu.memory_space<vmem>>, vector<8x128xf32>
      %c0_12 = arith.constant 0 : index
      %c0_13 = arith.constant 0 : index
      %13 = vector.load %arg4[%c0_12, %c0_13] : memref<8x128xf32, #tpu.memory_space<vmem>>, vector<8x128xf32>
      tpu.vector_store %arg4[%c0_12, %c0_13], %12 {strides = array<i32>} : memref<8x128xf32, #tpu.memory_space<vmem>>, vector<8x128xf32>,
    } else {
    }
    return
  }
  func.func @transform_0(%arg0: i32, %arg1: i32) -> (i32, i32) {
    %c0_i32 = arith.constant 0 : i32
    return %arg0, %arg1 : i32, i32
  }
  func.func @transform_1(%arg0: i32, %arg1: i32) -> (i32, i32) {
    %c0_i32 = arith.constant 0 : i32
    %c0_i32_0 = arith.constant 0 : i32
    return %arg1, %c0_i32 : i32, i32
  }
  func.func @transform_2(%arg0: i32, %arg1: i32) -> (i32, i32) {
    %c0_i32 = arith.constant 0 : i32
    %c0_i32_0 = arith.constant 0 : i32
    return %arg0, %c0_i32 : i32, i32
  }
}

</mosaic_0001>

<llo_original>
// kernel: blm_forward_sample.2
$region0: #{blm_forward_sample.2}
  #allocation0 [shape = 'u32[]', space=smem, size = 0x4, offset = 0x4, fixed_abs, tag = 'smem constant byte address 0x4 - core index']
  #allocation1 [shape = 'u32[144,128]{1,0:T(1,128)}', space=vmem, size = 0x12000, scoped, tag = 'internal scratch']
  %s0 = inlined_call_operand.vmem [shape: f32[32,128], index: 0, kind: input, shape index: {}]
  %s1 = inlined_call_operand.vmem [shape: f32[32,128], index: 1, kind: input, shape index: {}]
  %s2 = inlined_call_operand.vmem [shape: f32[32,128], index: 2, kind: input, shape index: {}]
  %s3 = inlined_call_operand.vmem [shape: f32[32,128], index: 3, kind: output, shape index: {}]
  %s4 = sld [smem:[#allocation0]]
  $region22: #{blm_forward_sample.2} parent=0
    _
  %s6 = ssub.s32 1, %s4
  %s7 = scalar_select 0, %s6, %s4
  // Predicated region
  $region2: #{blm_forward_sample.2} parent=0 // pred_check
    _
  $region3: #{blm_forward_sample.2} parent=0 // pred_check_branch
    %9 = sbr.rel (0) target = $region5
  $region4: #{blm_forward_sample.2} parent=0 // pred_region
    _
  $region5: #{blm_forward_sample.2} parent=0 // pred_fallthru
    _
  // Predicated region
  $region6: #{blm_forward_sample.2} parent=0 // pred_check
    _
  $region7: #{blm_forward_sample.2} parent=0 // pred_check_branch
    %11 = sbr.rel (0) target = $region9
  $region8: #{blm_forward_sample.2} parent=0 // pred_region
    _
  $region9: #{blm_forward_sample.2} parent=0 // pred_fallthru
    _
  // Predicated region
  $region10: #{blm_forward_sample.2} parent=0 // pred_check
    _
  $region11: #{blm_forward_sample.2} parent=0 // pred_check_branch
    %13 = sbr.rel (0) target = $region13
  $region12: #{blm_forward_sample.2} parent=0 // pred_region
    _
  $region13: #{blm_forward_sample.2} parent=0 // pred_fallthru
    _
  %v14 = vld [vmem:[%s0] sm:$0xff]
  %v15 = vld [vmem:[%s0 + $0x8] sm:$0xff]
  %v16 = vld [vmem:[%s0 + $0x10] sm:$0xff]
  %v17 = vld [vmem:[%s0 + $0x18] sm:$0xff]
  %v18 = vld [vmem:[%s1] sm:$0xff]
  %v19 = vld [vmem:[%s1 + $0x8] sm:$0xff]
  %v20 = vld [vmem:[%s1 + $0x10] sm:$0xff]
  %v21 = vld [vmem:[%s1 + $0x18] sm:$0xff]
  %v22 = vld [vmem:[%s2] sm:$0xff]
  %v23 = vld [vmem:[%s2 + $0x8] sm:$0xff]
  %v24 = vld [vmem:[%s2 + $0x10] sm:$0xff]
  %v25 = vld [vmem:[%s2 + $0x18] sm:$0xff]
  %v26 = vmul.f32 %v18, %v22
  %v27 = vmul.f32 %v19, %v23
  %v28 = vmul.f32 %v20, %v24
  %v29 = vmul.f32 %v21, %v25
  %v30 = vadd.f32 %v14, %v26
  %v31 = vadd.f32 %v15, %v27
  %v32 = vadd.f32 %v16, %v28
  %v33 = vadd.f32 %v17, %v29
  %34 = vst [vmem:[%s3] sm:$0xff] %v30
  %35 = vst [vmem:[%s3 + $0x8] sm:$0xff] %v31
  %36 = vst [vmem:[%s3 + $0x10] sm:$0xff] %v32
  %37 = vst [vmem:[%s3 + $0x18] sm:$0xff] %v33
  // Predicated region
  $region14: #{blm_forward_sample.2} parent=0 // pred_check
    _
  $region15: #{blm_forward_sample.2} parent=0 // pred_check_branch
    %39 = sbr.rel (0) target = $region17
  $region16: #{blm_forward_sample.2} parent=0 // pred_region
    _
  $region17: #{blm_forward_sample.2} parent=0 // pred_fallthru
    _
  // Predicated region
  $region18: #{blm_forward_sample.2} parent=0 // pred_check
    _
  $region19: #{blm_forward_sample.2} parent=0 // pred_check_branch
    %41 = sbr.rel (0) target = $region21
  $region20: #{blm_forward_sample.2} parent=0 // pred_region
    _
  $region21: #{blm_forward_sample.2} parent=0 // pred_fallthru
    _

// kernel: blm_forward_sample.3
$region0: #{blm_forward_sample.3}
  #allocation0 [shape = 'u32[]', space=smem, size = 0x4, offset = 0x4, fixed_abs, tag = 'smem constant byte address 0x4 - core index']
  #allocation1 [shape = 'u32[144,128]{1,0:T(1,128)}', space=vmem, size = 0x12000, scoped, tag = 'internal scratch']
  #allocation2 [shape = 'f32[8,128]{1,0:T(8,128)}', space=vmem, size = 0x1000, scoped, tag = 'scratch operand']
  %s0 = inlined_call_operand.vmem [shape: f32[8,32], index: 0, kind: input, shape index: {}]
  %s1 = inlined_call_operand.vmem [shape: f32[32,128], index: 1, kind: input, shape index: {}]
  %s2 = inlined_call_operand.hbm [shape: f32[8,128], index: 2, kind: output, shape index: {}]
  %s3 = sld [smem:[#allocation0]]
  $region26: #{blm_forward_sample.3} parent=0
    _
  %s5 = ssub.s32 1, %s3
  %s6 = scalar_select 0, %s5, %s3
  $region1: #{blm_forward_sample.3} parent=0
    #allocation3 [shape = 'u8[4096]{0}', space=vmem, size = 0x1000, scoped, tag = 'output window, operand 0, single buffered']
    #allocation4 [shape = 's32[1]{0}', space=sflag, size = 0x4, scoped, tag = 'scoped memory for blm_forward_sample.3']
    %7 = vsyncpa [#allocation4], 0
    // Predicated region
    $region2: #{blm_forward_sample.3} parent=1 // pred_check
      _
    $region3: #{blm_forward_sample.3} parent=1 // pred_check_branch
      %9 = sbr.rel (0) target = $region5
    $region4: #{blm_forward_sample.3} parent=1 // pred_region
      _
    $region5: #{blm_forward_sample.3} parent=1 // pred_fallthru
      _
    // Predicated region
    $region6: #{blm_forward_sample.3} parent=1 // pred_check
      _
    $region7: #{blm_forward_sample.3} parent=1 // pred_check_branch
      %11 = sbr.rel (0) target = $region9
    $region8: #{blm_forward_sample.3} parent=1 // pred_region
      _
    $region9: #{blm_forward_sample.3} parent=1 // pred_fallthru
      _
    %p12 = scmp.eq.s32.totalorder 0, 0
    // Predicated region
    $region10: #{blm_forward_sample.3} parent=1 // pred_check
      %p13 = pneg %p12
    $region11: #{blm_forward_sample.3} parent=1 // pred_check_branch
      %15 = sbr.rel (%p13) target = $region13
    $region12: #{blm_forward_sample.3} parent=1 // pred_region
      %16 = vst [vmem:[#allocation2] sm:$0xff] 0.0
    $region13: #{blm_forward_sample.3} parent=1 // pred_fallthru
      _
    %v17 = vld [vmem:[#allocation2] sm:$0xff]
    %v18 = vld [vmem:[%s0] sm:$0xff]
    %v19 = vld [vmem:[%s1] sm:$0xff]
    %v20 = vld [vmem:[%s1 + $0x8] sm:$0xff]
    %v21 = vld [vmem:[%s1 + $0x10] sm:$0xff]
    %v22 = vld [vmem:[%s1 + $0x18] sm:$0xff]
    %vm23 = vcmask 261120
    %v25 = vsel %vm23, %v18, 0
    %27 = vmatprep.subr.mxu0 0.0
    %28 = vmatpush1.msra.mxu0 %v19
    %29 = vmatprep.subr.mxu0 0.0
    %30 = vmatpush1.msra.mxu0 %v20
    %31 = vmatprep.subr.mxu0 0.0
    %32 = vmatpush1.msra.mxu0 %v21
    %33 = vmatprep.subr.mxu0 0.0
    %34 = vmatpush1.msra.mxu0 %v22
    %35 = vmatprep.subr.mxu0 0.0
    %36 = vmatpush1.msra.mxu0 0.0
    %37 = vmatprep.subr.mxu0 0.0
    %38 = vmatpush1.msra.mxu0 0.0
    %39 = vmatprep.subr.mxu0 0.0
    %40 = vmatpush1.msra.mxu0 0.0
    %41 = vmatprep.subr.mxu0 0.0
    %42 = vmatpush1.msra.mxu0 0.0
    %43 = vmatprep.subr.mxu0 0.0
    %44 = vmatpush1.msra.mxu0 0.0
    %45 = vmatprep.subr.mxu0 0.0
    %46 = vmatpush1.msra.mxu0 0.0
    %47 = vmatprep.subr.mxu0 0.0
    %48 = vmatpush1.msra.mxu0 0.0
    %49 = vmatprep.subr.mxu0 0.0
    %50 = vmatpush1.msra.mxu0 0.0
    %51 = vmatprep.subr.mxu0 0.0
    %52 = vmatpush1.msra.mxu0 0.0
    %53 = vmatprep.subr.mxu0 0.0
    %54 = vmatpush1.msra.mxu0 0.0
    %55 = vmatprep.subr.mxu0 0.0
    %56 = vmatpush1.msra.mxu0 0.0
    %57 = vmatprep.subr.mxu0 0.0
    %58 = vmatpush1.msra.mxu0 0.0
    %59 = vmatprep.subr.mxu0 0.0
    %60 = vmatpush1.msra.mxu0 0.0
    %61 = vmatprep.subr.mxu0 0.0
    %62 = vmatpush1.msra.mxu0 0.0
    %63 = vmatprep.subr.mxu0 0.0
    %64 = vmatpush1.msra.mxu0 0.0
    %65 = vmatprep.subr.mxu0 0.0
    %66 = vmatpush1.msra.mxu0 0.0
    %67 = vmatprep.subr.mxu0 0.0
    %68 = vmatpush1.msra.mxu0 0.0
    %69 = vmatprep.subr.mxu0 0.0
    %70 = vmatpush1.msra.mxu0 0.0
    %71 = vmatprep.subr.mxu0 0.0
    %72 = vmatpush1.msra.mxu0 0.0
    %73 = vmatprep.subr.mxu0 0.0
    %74 = vmatpush1.msra.mxu0 0.0
    %75 = vmatprep.subr.mxu0 0.0
    %76 = vmatpush1.msra.mxu0 0.0
    %77 = vmatprep.subr.mxu0 0.0
    %78 = vmatpush1.msra.mxu0 0.0
    %79 = vmatprep.subr.mxu0 0.0
    %80 = vmatpush1.msra.mxu0 0.0
    %81 = vmatprep.subr.mxu0 0.0
    %82 = vmatpush1.msra.mxu0 0.0
    %83 = vmatprep.subr.mxu0 0.0
    %84 = vmatpush1.msra.mxu0 0.0
    %85 = vmatprep.subr.mxu0 0.0
    %86 = vmatpush1.msra.mxu0 0.0
    %87 = vmatprep.subr.mxu0 0.0
    %88 = vmatpush1.msra.mxu0 0.0
    %89 = vmatprep.subr.mxu0 0.0
    %90 = vmatpush1.msra.mxu0 0.0
    %91 = vmatprep.mubr.f32.mxu0 0.0
    %92 = vmatmul.mubr.f32.gmra.mrb[0].mxu0 %v25
    %v93 = vpop.f32.mrb[0].mxu0
    %v94 = vadd.f32 0.0, %v93
    %v95 = vpop.f32.mrb[0].mxu0
    %96 = vdwg.mxu0
    %v97 = vadd.f32 %v17, %v94
    %98 = vst [vmem:[#allocation2] sm:$0xff] %v97
    // Predicated region
    $region14: #{blm_forward_sample.3} parent=1 // pred_check
      %p99 = pneg %p12
    $region15: #{blm_forward_sample.3} parent=1 // pred_check_branch
      %101 = sbr.rel (%p99) target = $region17
    $region16: #{blm_forward_sample.3} parent=1 // pred_region
      %v102 = vld [vmem:[#allocation2] sm:$0xff]
      %103 = vst [vmem:[#allocation3] sm:$0xff] %v102
    $region17: #{blm_forward_sample.3} parent=1 // pred_fallthru
      _
    // Predicated region
    $region18: #{blm_forward_sample.3} parent=1 // pred_check
      _
    $region19: #{blm_forward_sample.3} parent=1 // pred_check_branch
      %105 = sbr.rel (0) target = $region21
    $region20: #{blm_forward_sample.3} parent=1 // pred_region
      %s107 = ssub.s32 128, 128
      %108 = vsyncadd [#allocation4], %s107
      %s110 = sshll.u32 [#allocation3], 4
      %s111 = int_to_ptr.vmem [resolvable:$true] %s110
      %113 = dma.vmem_to_hbm [thread:$0]  %s111, 128, %s2, [#allocation4]
    $region21: #{blm_forward_sample.3} parent=1 // pred_fallthru
      _
    // Predicated region
    $region22: #{blm_forward_sample.3} parent=1 // pred_check
      _
    $region23: #{blm_forward_sample.3} parent=1 // pred_check_branch
      %115 = sbr.rel (0) target = $region25
    $region24: #{blm_forward_sample.3} parent=1 // pred_region
      %116 = dma.done [#allocation4], 128
    $region25: #{blm_forward_sample.3} parent=1 // pred_fallthru
      _
    %117 = vsyncpa [#allocation4], 1

</llo_original>
